<compile_context>
chip_gen: v7x
topology: tpu7x:2x2x1
jax: 0.10.0
libtpu: 0.0.40
codegen_flags: <defaults>
</compile_context>

<pallas_src>
import functools

import jax
import jax.numpy as jnp
from jax import lax
from jax.experimental import pallas as pl
from jax.experimental.pallas import tpu as pltpu

EPS = 1e-5


def _round_up(n, m):
    return ((n + m - 1) // m) * m


def _cdiv(a, b):
    return (a + b - 1) // b


def classblock_kernel(x_ref, gb_ref, wt_ref, b_ref, o_ref, stats_ref,
                      *, inv_b, pad_rows, cache_stats):
    """One (C-tile j, D-tile k) grid step.

    x_ref    : (B_pad, td)   input features, native dtype (upcast in-kernel)
    gb_ref   : (2, td)       row 0 = gamma, row 1 = beta (f32)
    wt_ref   : (td, tc)      W^T tile (bf16 for the MXU)
    b_ref    : (1, tc)       linear bias tile (f32)
    o_ref    : (B_pad, tc)   f32 output block, resident across the D (k) axis
    stats_ref: (num_d, 2, td) cached BN scale/shift per D-tile (f32)
    """
    j = pl.program_id(0)          # C tile (output columns)
    k = pl.program_id(1)          # D tile (reduction axis)

    # Init the resident output block with the linear bias on the first D-tile.
    @pl.when(k == 0)
    def _():
        o_ref[...] = jnp.broadcast_to(
            b_ref[...].astype(jnp.float32), o_ref.shape)

    x = x_ref[...].astype(jnp.float32)                       # (B_pad, td)

    def bn_scale_shift():
        # Two-pass (centered) batch statistics.  Padded batch rows are zero;
        # their (0 - mean)^2 contribution is removed exactly via pad_rows.
        mean = jnp.sum(x, axis=0, keepdims=True) * inv_b      # (1, td)
        xc = x - mean
        css = jnp.sum(xc * xc, axis=0, keepdims=True)
        var = jnp.maximum((css - pad_rows * mean * mean) * inv_b, 0.0)
        gamma = gb_ref[0:1, :]
        beta = gb_ref[1:2, :]
        scale = lax.rsqrt(var + EPS) * gamma                  # gamma folded in
        shift = beta - mean * scale
        return scale, shift

    if cache_stats:
        # Multiple C tiles: compute BN stats for this D-tile only on the first
        # C tile and reuse them for j > 0 (x is re-streamed but the two (B,td)
        # reductions are not recomputed).
        @pl.when(j == 0)
        def _():
            scale0, shift0 = bn_scale_shift()
            stats_ref[k] = jnp.concatenate([scale0, shift0], axis=0)
        st = stats_ref[k]
        scale = st[0:1, :]
        shift = st[1:2, :]
    else:
        scale, shift = bn_scale_shift()

    # BatchNorm as a single affine: y = x * scale + shift.
    y = x * scale + shift

    # Linear partial product: bf16 MXU inputs, f32 accumulation straight into
    # the resident output block (no extra accumulator scratch / final copy).
    o_ref[...] += jnp.dot(y.astype(wt_ref.dtype), wt_ref[...],
                          preferred_element_type=jnp.float32)


def classblock_forward(x, gamma, beta, weight, bias, *, mm_dtype=jnp.bfloat16):
    """x: (B, D); gamma/beta: (D,); weight: (C, D); bias: (C,). Returns f32 (B, C)."""
    B, D = x.shape
    C = weight.shape[0]

    # bf16 vregs pack 16 sublanes -> pad the batch to a multiple of 16.
    B_pad = _round_up(B, 16)
    D_pad = _round_up(D, 128)
    C_pad = _round_up(C, 128)

    x_isz = jnp.dtype(x.dtype).itemsize
    mm_isz = jnp.dtype(mm_dtype).itemsize

    # Conservative live-buffer budget (v7x has only 64 MiB VMEM per TC).
    budget = 36 << 20

    def footprint(td, tc):
        num_d = _cdiv(D_pad, td)
        return (2 * B_pad * td * x_isz          # x (double-buffered)
                + 2 * 8 * td * 4                # gamma/beta
                + 2 * td * tc * mm_isz          # W^T (double-buffered)
                + 2 * 8 * tc * 4                # linear bias
                + 2 * B_pad * tc * 4            # f32 output block
                + num_d * 8 * td * 4)           # BN stats scratch

    # Prefer the biggest tiles that fit: ideally a single C tile and a single
    # (or few) D tiles so x is streamed once and grid-step overhead is minimal.
    td, tc = D_pad, C_pad
    while footprint(td, tc) > budget:
        if td > 512:
            td = _round_up(td // 2, 128)
        elif tc > 512:
            tc = _round_up(tc // 2, 128)
        elif td > 128:
            td = _round_up(td // 2, 128)
        elif tc > 128:
            tc = _round_up(tc // 2, 128)
        else:
            break

    D_pad = _round_up(D_pad, td)
    C_pad = _round_up(C_pad, tc)
    num_d = D_pad // td
    num_c = C_pad // tc

    # Zero-padding keeps everything exact: padded batch rows are excluded from
    # the statistics (real-B divisor + pad_rows correction), padded features /
    # classes hit zero weight rows/cols, and the extra output rows/cols are
    # sliced off.  Skip the copy entirely when already aligned.
    if (B_pad, D_pad) == (B, D):
        xp = x
    else:
        xp = jnp.zeros((B_pad, D_pad), dtype=x.dtype).at[:B, :D].set(x)

    gb = jnp.zeros((2, D_pad), dtype=jnp.float32)
    gb = gb.at[0, :].set(1.0)                         # gamma=1 on padded lanes
    gb = gb.at[0, :D].set(gamma.astype(jnp.float32))
    gb = gb.at[1, :D].set(beta.astype(jnp.float32))

    # NOTE: W^T transpose/cast/pad and the gb/bias packing are parameter-prep
    # work; under jit XLA hoists/fuses them, or precompute once per model.
    wt = jnp.zeros((D_pad, C_pad), dtype=mm_dtype).at[:D, :C].set(
        weight.T.astype(mm_dtype))
    b2 = jnp.zeros((1, C_pad), dtype=jnp.float32).at[0, :C].set(
        bias.astype(jnp.float32))

    vmem_limit = int(min(max(footprint(td, tc) + (4 << 20), 16 << 20), 48 << 20))

    kernel = functools.partial(
        classblock_kernel,
        inv_b=1.0 / float(B),
        pad_rows=float(B_pad - B),
        cache_stats=(num_c > 1),
    )

    # The C axis is only safely "parallel" when it has a single tile: with
    # multiple C tiles the cached BN stats create a j==0 -> j>0 dependency.
    c_sem = "parallel" if num_c == 1 else "arbitrary"

    out_padded = pl.pallas_call(
        kernel,
        out_shape=jax.ShapeDtypeStruct((B_pad, C_pad), jnp.float32),
        grid_spec=pltpu.PrefetchScalarGridSpec(
            num_scalar_prefetch=0,
            grid=(num_c, num_d),
            in_specs=[
                pl.BlockSpec((B_pad, td), lambda j, k: (0, k)),   # x
                pl.BlockSpec((2, td), lambda j, k: (0, k)),       # gamma/beta
                pl.BlockSpec((td, tc), lambda j, k: (k, j)),      # W^T (bf16)
                pl.BlockSpec((1, tc), lambda j, k: (0, j)),       # linear bias
            ],
            out_specs=pl.BlockSpec((B_pad, tc), lambda j, k: (0, j)),
            scratch_shapes=[pltpu.VMEM((num_d, 2, td), jnp.float32)],
        ),
        compiler_params=pltpu.CompilerParams(
            dimension_semantics=(c_sem, "arbitrary"),
            vmem_limit_bytes=vmem_limit,
        ),
    )(xp, gb, wt, b2)

    return out_padded[:B, :C]


if __name__ == "__main__":
    key = jax.random.PRNGKey(0)
    k_x, k_w = jax.random.split(key)

    B, D, C = 8, 32, 16          # batch, input_dim, class_num

    x = jax.random.normal(k_x, (B, D), dtype=jnp.float32)

    # BatchNorm1d default init: gamma = 1, beta = 0.
    gamma = jnp.ones((D,), dtype=jnp.float32)
    beta = jnp.zeros((D,), dtype=jnp.float32)

    # Linear per weights_init_classifier: weight ~ N(0, 0.001), bias = 0.
    weight = 0.001 * jax.random.normal(k_w, (C, D), dtype=jnp.float32)
    bias = jnp.zeros((C,), dtype=jnp.float32)

    out = classblock_forward(x, gamma, beta, weight, bias)
    jax.block_until_ready(out)

    # Pure-JAX f32 reference (kernel uses bf16 MXU inputs -> loose tolerance).
    mean = jnp.mean(x, axis=0, keepdims=True)
    var = jnp.mean((x - mean) ** 2, axis=0, keepdims=True)
    ref = ((x - mean) / jnp.sqrt(var + EPS)) * gamma + beta
    ref = ref @ weight.T + bias
    assert out.shape == ref.shape, "shape mismatch vs reference"
    assert jnp.allclose(out, ref, atol=5e-4, rtol=5e-2), "mismatch vs reference"

    print("KERNEL_OK")
</pallas_src>

<mosaic_0001>
module attributes {stable_mosaic.version = 11 : i64} {
  func.func @classblock_kernel(%arg0: i32, %arg1: i32, %arg2: memref<16x128xf32, #tpu.memory_space<vmem>>, %arg3: memref<2x128xf32, #tpu.memory_space<vmem>>, %arg4: memref<128x128xbf16, #tpu.memory_space<vmem>>, %arg5: memref<1x128xf32, #tpu.memory_space<vmem>>, %arg6: memref<16x128xf32, #tpu.memory_space<vmem>>, %arg7: memref<1x2x128xf32, #tpu.memory_space<vmem>>) attributes {dimension_semantics = [#tpu.dimension_semantics<parallel>, #tpu.dimension_semantics<arbitrary>], iteration_bounds = array<i64: 1, 1>, scalar_prefetch = 0 : i64, scratch_operands = 1 : i64, tpu.core_type = #tpu.core_type<tc>, window_params = [{transform_indices = @transform_0, window_bounds = array<i64: 16, 128>}, {transform_indices = @transform_1, window_bounds = array<i64: 2, 128>}, {transform_indices = @transform_2, window_bounds = array<i64: 128, 128>}, {transform_indices = @transform_3, window_bounds = array<i64: 1, 128>}, {transform_indices = @transform_4, window_bounds = array<i64: 16, 128>}]} {
    %c0_i32 = arith.constant 0 : i32
    %0 = arith.cmpi eq, %arg1, %c0_i32 : i32
    %1 = arith.extui %0 : i1 to i32
    %c0_i32_0 = arith.constant 0 : i32
    %2 = arith.cmpi ne, %1, %c0_i32_0 : i32
    scf.if %2 {
      %c0_18 = arith.constant 0 : index
      %c0_19 = arith.constant 0 : index
      %39 = vector.load %arg5[%c0_18, %c0_19] : memref<1x128xf32, #tpu.memory_space<vmem>>, vector<1x128xf32>
      %40 = vector.shape_cast %39 : vector<1x128xf32> to vector<1x128xf32>
      %41 = vector.broadcast %40 : vector<1x128xf32> to vector<16x128xf32>
      %c0_20 = arith.constant 0 : index
      %c0_21 = arith.constant 0 : index
      %42 = vector.load %arg6[%c0_20, %c0_21] : memref<16x128xf32, #tpu.memory_space<vmem>>, vector<16x128xf32>
      tpu.vector_store %arg6[%c0_20, %c0_21], %41 {strides = array<i32>} : memref<16x128xf32, #tpu.memory_space<vmem>>, vector<16x128xf32>,
    } else {
    }
    %c0 = arith.constant 0 : index
    %c0_1 = arith.constant 0 : index
    %3 = vector.load %arg2[%c0, %c0_1] : memref<16x128xf32, #tpu.memory_space<vmem>>, vector<16x128xf32>
    %cst = arith.constant dense<0.000000e+00> : vector<128xf32>
    %4 = vector.multi_reduction <add>, %3, %cst [0] : vector<16x128xf32> to vector<128xf32>
    %5 = vector.shape_cast %4 : vector<128xf32> to vector<1x128xf32>
    %cst_2 = arith.constant 1.250000e-01 : f32
    %6 = vector.broadcast %cst_2 : f32 to vector<1x128xf32>
    %7 = arith.mulf %5, %6 : vector<1x128xf32>
    %8 = vector.broadcast %7 : vector<1x128xf32> to vector<16x128xf32>
    %9 = arith.subf %3, %8 : vector<16x128xf32>
    %10 = arith.mulf %9, %9 : vector<16x128xf32>
    %cst_3 = arith.constant dense<0.000000e+00> : vector<128xf32>
    %11 = vector.multi_reduction <add>, %10, %cst_3 [0] : vector<16x128xf32> to vector<128xf32>
    %12 = vector.shape_cast %11 : vector<128xf32> to vector<1x128xf32>
    %cst_4 = arith.constant 8.000000e+00 : f32
    %13 = vector.broadcast %cst_4 : f32 to vector<1x128xf32>
    %14 = arith.mulf %13, %7 : vector<1x128xf32>
    %15 = arith.mulf %14, %7 : vector<1x128xf32>
    %16 = arith.subf %12, %15 : vector<1x128xf32>
    %cst_5 = arith.constant 1.250000e-01 : f32
    %17 = vector.broadcast %cst_5 : f32 to vector<1x128xf32>
    %18 = arith.mulf %16, %17 : vector<1x128xf32>
    %cst_6 = arith.constant 0.000000e+00 : f32
    %19 = vector.broadcast %cst_6 : f32 to vector<1x128xf32>
    %20 = arith.maximumf %18, %19 : vector<1x128xf32>
    %c0_7 = arith.constant 0 : index
    %c0_8 = arith.constant 0 : index
    %21 = vector.load %arg3[%c0_7, %c0_8] : memref<2x128xf32, #tpu.memory_space<vmem>>, vector<1x128xf32>
    %c1 = arith.constant 1 : index
    %c0_9 = arith.constant 0 : index
    %22 = vector.load %arg3[%c1, %c0_9] : memref<2x128xf32, #tpu.memory_space<vmem>>, vector<1x128xf32>
    %cst_10 = arith.constant 9.99999974E-6 : f32
    %23 = vector.broadcast %cst_10 : f32 to vector<1x128xf32>
    %24 = arith.addf %20, %23 : vector<1x128xf32>
    %25 = math.rsqrt %24 : vector<1x128xf32>
    %26 = arith.mulf %25, %21 : vector<1x128xf32>
    %27 = arith.mulf %7, %26 : vector<1x128xf32>
    %28 = arith.subf %22, %27 : vector<1x128xf32>
    %29 = vector.broadcast %26 : vector<1x128xf32> to vector<16x128xf32>
    %30 = arith.mulf %3, %29 : vector<16x128xf32>
    %31 = vector.broadcast %28 : vector<1x128xf32> to vector<16x128xf32>
    %32 = arith.addf %30, %31 : vector<16x128xf32>
    %c0_11 = arith.constant 0 : index
    %c0_12 = arith.constant 0 : index
    %33 = vector.load %arg6[%c0_11, %c0_12] : memref<16x128xf32, #tpu.memory_space<vmem>>, vector<16x128xf32>
    %34 = arith.truncf %32 : vector<16x128xf32> to vector<16x128xbf16>
    %c0_13 = arith.constant 0 : index
    %c0_14 = arith.constant 0 : index
    %35 = vector.load %arg4[%c0_13, %c0_14] : memref<128x128xbf16, #tpu.memory_space<vmem>>, vector<128x128xbf16>
    %cst_15 = arith.constant dense<0.000000e+00> : vector<16x128xf32>
    %36 = tpu.matmul %34, %35, %cst_15 {dimension_numbers = #tpu.dot_dimension_numbers<[1], [0], [0], [1], [0, 0, 1, 1], [], []>} : vector<16x128xbf16>, vector<128x128xbf16>, vector<16x128xf32> -> vector<16x128xf32>
    %37 = arith.addf %33, %36 : vector<16x128xf32>
    %c0_16 = arith.constant 0 : index
    %c0_17 = arith.constant 0 : index
    %38 = vector.load %arg6[%c0_16, %c0_17] : memref<16x128xf32, #tpu.memory_space<vmem>>, vector<16x128xf32>
    tpu.vector_store %arg6[%c0_16, %c0_17], %37 {strides = array<i32>} : memref<16x128xf32, #tpu.memory_space<vmem>>, vector<16x128xf32>,
    return
  }
  func.func @transform_0(%arg0: i32, %arg1: i32) -> (i32, i32) {
    %c0_i32 = arith.constant 0 : i32
    %c0_i32_0 = arith.constant 0 : i32
    return %c0_i32, %arg1 : i32, i32
  }
  func.func @transform_1(%arg0: i32, %arg1: i32) -> (i32, i32) {
    %c0_i32 = arith.constant 0 : i32
    %c0_i32_0 = arith.constant 0 : i32
    return %c0_i32, %arg1 : i32, i32
  }
  func.func @transform_2(%arg0: i32, %arg1: i32) -> (i32, i32) {
    %c0_i32 = arith.constant 0 : i32
    return %arg1, %arg0 : i32, i32
  }
  func.func @transform_3(%arg0: i32, %arg1: i32) -> (i32, i32) {
    %c0_i32 = arith.constant 0 : i32
    %c0_i32_0 = arith.constant 0 : i32
    return %c0_i32, %arg0 : i32, i32
  }
  func.func @transform_4(%arg0: i32, %arg1: i32) -> (i32, i32) {
    %c0_i32 = arith.constant 0 : i32
    %c0_i32_0 = arith.constant 0 : i32
    return %c0_i32, %arg0 : i32, i32
  }
}

</mosaic_0001>

<llo_original>
// kernel: tpu_custom_call.1
$region0: #{tpu_custom_call.1}
  #allocation0 [shape = 'u32[]', space=smem, size = 0x4, offset = 0x4, fixed_abs, tag = 'smem constant byte address 0x4 - core index']
  #allocation1 [shape = 'u32[144,128]{1,0:T(1,128)}', space=vmem, size = 0x12000, scoped, tag = 'internal scratch']
  #allocation2 [shape = 'f32[1,2,128]{2,1,0:T(2,128)}', space=vmem, size = 0x400, scoped, tag = 'scratch operand']
  %s0 = inlined_call_operand.hbm [shape: f32[16,128], index: 0, kind: input, shape index: {}]
  %s1 = inlined_call_operand.vmem [shape: f32[2,128], index: 1, kind: input, shape index: {}]
  %s2 = inlined_call_operand.hbm [shape: bf16[128,128], index: 2, kind: input, shape index: {}]
  %s3 = inlined_call_operand.vmem [shape: f32[1,128], index: 3, kind: input, shape index: {}]
  %s4 = inlined_call_operand.hbm [shape: f32[16,128], index: 4, kind: output, shape index: {}]
  %s5 = sld [smem:[#allocation0]]
  $region38: #{tpu_custom_call.1} parent=0
    _
  %s7 = ssub.s32 1, %s5
  %s8 = scalar_select 0, %s7, %s5
  $region1: #{tpu_custom_call.1} parent=0
    #allocation3 [shape = 'u8[8192]{0}', space=vmem, size = 0x2000, scoped, tag = 'input window, operand 0, single buffered']
    #allocation4 [shape = 's32[1]{0}', space=sflag, size = 0x4, scoped, tag = 'scoped memory for tpu_custom_call.1']
    #allocation5 [shape = 's32[1]{0}', space=sflag, size = 0x4, scoped, tag = 'scoped memory for tpu_custom_call.1']
    #allocation6 [shape = 'u8[32768]{0}', space=vmem, size = 0x8000, scoped, tag = 'input window, operand 2, single buffered']
    #allocation7 [shape = 's32[1]{0}', space=sflag, size = 0x4, scoped, tag = 'scoped memory for tpu_custom_call.1']
    #allocation8 [shape = 'u8[8192]{0}', space=vmem, size = 0x2000, scoped, tag = 'output window, operand 0, single buffered']
    %9 = vsyncpa [#allocation4], 0
    %10 = vsyncpa [#allocation7], 0
    %11 = vsyncpa [#allocation5], 0
    // Predicated region
    $region2: #{tpu_custom_call.1} parent=1 // pred_check
      _
    $region3: #{tpu_custom_call.1} parent=1 // pred_check_branch
      %13 = sbr.rel (0) target = $region5
    $region4: #{tpu_custom_call.1} parent=1 // pred_region
      %s15 = ssub.s32 256, 256
      %16 = vsyncadd [#allocation4], %s15
      %s17 = sshll.u32 [#allocation3], 4
      %s18 = int_to_ptr.vmem [resolvable:$true] %s17
      %23 = dma.hbm_to_vmem [thread:$0]  %s0, 256, %s18, [#allocation4], 128, 128, 8
    $region5: #{tpu_custom_call.1} parent=1 // pred_fallthru
      _
    // Predicated region
    $region6: #{tpu_custom_call.1} parent=1 // pred_check
      _
    $region7: #{tpu_custom_call.1} parent=1 // pred_check_branch
      %25 = sbr.rel (0) target = $region9
    $region8: #{tpu_custom_call.1} parent=1 // pred_region
      _
    $region9: #{tpu_custom_call.1} parent=1 // pred_fallthru
      _
    // Predicated region
    $region10: #{tpu_custom_call.1} parent=1 // pred_check
      _
    $region11: #{tpu_custom_call.1} parent=1 // pred_check_branch
      %27 = sbr.rel (0) target = $region13
    $region12: #{tpu_custom_call.1} parent=1 // pred_region
      %s29 = ssub.s32 1024, 1024
      %30 = vsyncadd [#allocation7], %s29
      %s31 = sshll.u32 [#allocation6], 4
      %s32 = int_to_ptr.vmem [resolvable:$true] %s31
      %37 = dma.hbm_to_vmem [thread:$0]  %s2, 1024, %s32, [#allocation7], 64, 64, 4
    $region13: #{tpu_custom_call.1} parent=1 // pred_fallthru
      _
    // Predicated region
    $region14: #{tpu_custom_call.1} parent=1 // pred_check
      _
    $region15: #{tpu_custom_call.1} parent=1 // pred_check_branch
      %39 = sbr.rel (0) target = $region17
    $region16: #{tpu_custom_call.1} parent=1 // pred_region
      _
    $region17: #{tpu_custom_call.1} parent=1 // pred_fallthru
      _
    // Predicated region
    $region18: #{tpu_custom_call.1} parent=1 // pred_check
      _
    $region19: #{tpu_custom_call.1} parent=1 // pred_check_branch
      %41 = sbr.rel (0) target = $region21
    $region20: #{tpu_custom_call.1} parent=1 // pred_region
      %42 = dma.done [#allocation4], 256
    $region21: #{tpu_custom_call.1} parent=1 // pred_fallthru
      _
    // Predicated region
    $region22: #{tpu_custom_call.1} parent=1 // pred_check
      _
    $region23: #{tpu_custom_call.1} parent=1 // pred_check_branch
      %44 = sbr.rel (0) target = $region25
    $region24: #{tpu_custom_call.1} parent=1 // pred_region
      %45 = dma.done [#allocation7], 1024
    $region25: #{tpu_custom_call.1} parent=1 // pred_fallthru
      _
    %p47 = scmp.eq.s32.totalorder 0, 0
    // Predicated region
    $region26: #{tpu_custom_call.1} parent=1 // pred_check
      %p48 = pneg %p47
    $region27: #{tpu_custom_call.1} parent=1 // pred_check_branch
      %50 = sbr.rel (%p48) target = $region29
    $region28: #{tpu_custom_call.1} parent=1 // pred_region
      %v51 = vld [vmem:[%s3] sm:$0x1]
      %v53 = vlaneseq
      %v54 = vshrl.u32 %v53, 7
      %v55 = vsub.s32 0, %v54
      %v56 = vrot.slane %v51, %v55
      %58 = vst [vmem:[#allocation8] sm:$0xff] %v56
      %59 = vst [vmem:[#allocation8 + $0x8] sm:$0xff] %v56
    $region29: #{tpu_custom_call.1} parent=1 // pred_fallthru
      _
    %v60 = vld [vmem:[#allocation3] sm:$0xff]
    %v61 = vld [vmem:[#allocation3 + $0x8] sm:$0xff]
    %v62 = vadd.f32 %v60, %v61
    %v63 = vrot.slane %v62, 4
    %v64 = vadd.f32 %v62, %v63
    %v65 = vrot.slane %v64, 2
    %v66 = vadd.f32 %v64, %v65
    %v67 = vrot.slane %v66, 1
    %v68 = vadd.f32 %v66, %v67
    %v69 = vmul.f32 %v68, 0.125
    %v70 = vsub.f32 %v60, %v69
    %v71 = vsub.f32 %v61, %v69
    %v72 = vmul.f32 %v70, %v70
    %v73 = vmul.f32 %v71, %v71
    %v74 = vadd.f32 %v72, %v73
    %v75 = vrot.slane %v74, 4
    %v76 = vadd.f32 %v74, %v75
    %v77 = vrot.slane %v76, 2
    %v78 = vadd.f32 %v76, %v77
    %v79 = vrot.slane %v78, 1
    %v80 = vadd.f32 %v78, %v79
    %v81 = vmul.f32 %v69, 8.0
    %v82 = vmul.f32 %v81, %v69
    %v83 = vsub.f32 %v80, %v82
    %v84 = vmul.f32 %v83, 0.125
    %v85 = vmax.f32 %v84, 0.0
    %v86 = vld [vmem:[%s1] sm:$0x1]
    %v87 = vld [vmem:[%s1 + $0x1] sm:$0x1]
    %v88 = vadd.f32 %v85, 1e-05
    %v89 = vrsqrt.pop %v88
    %v90 = vmul.f32 %v89, %v86
    %v91 = vmul.f32 %v69, %v90
    %v92 = vsub.f32 %v87, %v91
    %v93 = vlaneseq
    %v94 = vshrl.u32 %v93, 7
    %v95 = vsub.s32 0, %v94
    %v96 = vrot.slane %v90, %v95
    %v97 = vmul.f32 %v60, %v96
    %v98 = vmul.f32 %v61, %v96
    %v99 = vlaneseq
    %v100 = vshrl.u32 %v99, 7
    %v101 = vsub.s32 0, %v100
    %v102 = vrot.slane %v92, %v101
    %v103 = vadd.f32 %v97, %v102
    %v104 = vadd.f32 %v98, %v102
    %v105 = vld [vmem:[#allocation8] sm:$0xff]
    %v106 = vld [vmem:[#allocation8 + $0x8] sm:$0xff]
    %v107 = vpack.c.bf16 %v104, %v103
    %v108 = vld [vmem:[#allocation6] sm:$0xf]
    %v109 = vld [vmem:[#allocation6 + $0x4] sm:$0xf]
    %v110 = vld [vmem:[#allocation6 + $0x8] sm:$0xf]
    %v111 = vld [vmem:[#allocation6 + $0xc] sm:$0xf]
    %v112 = vld [vmem:[#allocation6 + $0x10] sm:$0xf]
    %v113 = vld [vmem:[#allocation6 + $0x14] sm:$0xf]
    %v114 = vld [vmem:[#allocation6 + $0x18] sm:$0xf]
    %v115 = vld [vmem:[#allocation6 + $0x1c] sm:$0xf]
    %v116 = vld [vmem:[#allocation6 + $0x20] sm:$0xf]
    %v117 = vld [vmem:[#allocation6 + $0x24] sm:$0xf]
    %v118 = vld [vmem:[#allocation6 + $0x28] sm:$0xf]
    %v119 = vld [vmem:[#allocation6 + $0x2c] sm:$0xf]
    %v120 = vld [vmem:[#allocation6 + $0x30] sm:$0xf]
    %v121 = vld [vmem:[#allocation6 + $0x34] sm:$0xf]
    %v122 = vld [vmem:[#allocation6 + $0x38] sm:$0xf]
    %v123 = vld [vmem:[#allocation6 + $0x3c] sm:$0xf]
    %v140 = vunpack.c.l.b16 %v108
    %v141 = vunpack.c.l.b16 %v109
    %v142 = vunpack.c.l.b16 %v110
    %v143 = vunpack.c.l.b16 %v111
    %v144 = vunpack.c.l.b16 %v112
    %v145 = vunpack.c.l.b16 %v113
    %v146 = vunpack.c.l.b16 %v114
    %v147 = vunpack.c.l.b16 %v115
    %v148 = vunpack.c.l.b16 %v116
    %v149 = vunpack.c.l.b16 %v117
    %v150 = vunpack.c.l.b16 %v118
    %v151 = vunpack.c.l.b16 %v119
    %v152 = vunpack.c.l.b16 %v120
    %v153 = vunpack.c.l.b16 %v121
    %v154 = vunpack.c.l.b16 %v122
    %v155 = vunpack.c.l.b16 %v123
    %v156 = vpack.c.b16 %v141, %v140
    %v157 = vpack.c.b16 %v143, %v142
    %v158 = vpack.c.b16 %v145, %v144
    %v159 = vpack.c.b16 %v147, %v146
    %v160 = vpack.c.b16 %v149, %v148
    %v161 = vpack.c.b16 %v151, %v150
    %v162 = vpack.c.b16 %v153, %v152
    %v163 = vpack.c.b16 %v155, %v154
    %172 = vmatprep.subr.bf16.mxu0 0
    %173 = vmatpush1.bf16.msra.mxu0 %v156
    %174 = vmatprep.subr.bf16.mxu0 0
    %175 = vmatpush1.bf16.msra.mxu0 %v157
    %176 = vmatprep.subr.bf16.mxu0 0
    %177 = vmatpush1.bf16.msra.mxu0 %v158
    %178 = vmatprep.subr.bf16.mxu0 0
    %179 = vmatpush1.bf16.msra.mxu0 %v159
    %180 = vmatprep.subr.bf16.mxu0 0
    %181 = vmatpush1.bf16.msra.mxu0 %v160
    %182 = vmatprep.subr.bf16.mxu0 0
    %183 = vmatpush1.bf16.msra.mxu0 %v161
    %184 = vmatprep.subr.bf16.mxu0 0
    %185 = vmatpush1.bf16.msra.mxu0 %v162
    %186 = vmatprep.subr.bf16.mxu0 0
    %187 = vmatpush1.bf16.msra.mxu0 %v163
    %188 = vmatprep.subr.bf16.mxu0 0
    %189 = vmatpush1.bf16.msra.mxu0 0
    %190 = vmatprep.subr.bf16.mxu0 0
    %191 = vmatpush1.bf16.msra.mxu0 0
    %192 = vmatprep.subr.bf16.mxu0 0
    %193 = vmatpush1.bf16.msra.mxu0 0
    %194 = vmatprep.subr.bf16.mxu0 0
    %195 = vmatpush1.bf16.msra.mxu0 0
    %196 = vmatprep.subr.bf16.mxu0 0
    %197 = vmatpush1.bf16.msra.mxu0 0
    %198 = vmatprep.subr.bf16.mxu0 0
    %199 = vmatpush1.bf16.msra.mxu0 0
    %200 = vmatprep.subr.bf16.mxu0 0
    %201 = vmatpush1.bf16.msra.mxu0 0
    %202 = vmatprep.subr.bf16.mxu0 0
    %203 = vmatpush1.bf16.msra.mxu0 0
    %204 = vmatprep.mubr.bf16.mxu0 0
    %205 = vmatmul.mubr.bf16.gmra.mrb[0].mxu0 %v107
    %v206 = vpop.f32.mrb[0].mxu0
    %v207 = vadd.f32 0.0, %v206
    %v208 = vpop.f32.mrb[0].mxu0
    %v209 = vpop.f32.mrb[0].mxu0
    %v210 = vadd.f32 0.0, %v209
    %v211 = vpop.f32.mrb[0].mxu0
    %212 = vdwg.mxu0
    %v213 = vadd.f32 %v105, %v207
    %v214 = vadd.f32 %v106, %v210
    %215 = vst [vmem:[#allocation8] sm:$0xff] %v213
    %216 = vst [vmem:[#allocation8 + $0x8] sm:$0xff] %v214
    // Predicated region
    $region30: #{tpu_custom_call.1} parent=1 // pred_check
      _
    $region31: #{tpu_custom_call.1} parent=1 // pred_check_branch
      %218 = sbr.rel (0) target = $region33
    $region32: #{tpu_custom_call.1} parent=1 // pred_region
      %s220 = ssub.s32 256, 256
      %221 = vsyncadd [#allocation5], %s220
      %s222 = sshll.u32 [#allocation8], 4
      %s223 = int_to_ptr.vmem [resolvable:$true] %s222
      %228 = dma.vmem_to_hbm [thread:$0]  %s223, 256, %s4, [#allocation5], 128, 128, 8
    $region33: #{tpu_custom_call.1} parent=1 // pred_fallthru
      _
    // Predicated region
    $region34: #{tpu_custom_call.1} parent=1 // pred_check
      _
    $region35: #{tpu_custom_call.1} parent=1 // pred_check_branch
      %230 = sbr.rel (0) target = $region37
    $region36: #{tpu_custom_call.1} parent=1 // pred_region
      %231 = dma.done [#allocation5], 256
    $region37: #{tpu_custom_call.1} parent=1 // pred_fallthru
      _
    %232 = vsyncpa [#allocation4], 1
    %233 = vsyncpa [#allocation7], 1
    %234 = vsyncpa [#allocation5], 1

</llo_original>
